<compile_context>
chip_gen: v7x
topology: tpu7x:2x2x1
jax: 0.10.0
libtpu: 0.0.40
codegen_flags: <defaults>
</compile_context>

<pallas_src>
import functools

import jax
import jax.numpy as jnp
from jax.experimental import pallas as pl
from jax.experimental.pallas import tpu as pltpu


def _round_up(x, m):
    return (x + m - 1) // m * m


def _supcon_kernel(*refs, has_pair_mask, a_rows, k_cols, inv_temp, loss_scale,
                   ta, tk):
    if has_pair_mask:
        af_ref, cf_ref, pm_ref, o_ref, m_ref, l_ref, ps_ref, pc_ref = refs
        al_ref = cl_ref = None
    else:
        af_ref, cf_ref, al_ref, cl_ref, o_ref, m_ref, l_ref, ps_ref, pc_ref = refs
        pm_ref = None

    i = pl.program_id(0)          # anchor-row tile     ("parallel")
    j = pl.program_id(1)          # contrast-col tile   ("arbitrary" reduction)

    @pl.when(j == 0)
    def _init():
        m_ref[...] = jnp.full_like(m_ref, -jnp.inf)
        l_ref[...] = jnp.zeros_like(l_ref)
        ps_ref[...] = jnp.zeros_like(ps_ref)
        pc_ref[...] = jnp.zeros_like(pc_ref)

    # MXU: s[r, c] = <anchor_r, contrast_c> / temperature  -> (TA, TK) f32.
    s = jax.lax.dot_general(af_ref[...], cf_ref[...],
                            (((1,), (1,)), ((), ())),
                            preferred_element_type=jnp.float32) * inv_temp

    row_ids = i * ta + jax.lax.broadcasted_iota(jnp.int32, (ta, tk), 0)
    col_ids = j * tk + jax.lax.broadcasted_iota(jnp.int32, (ta, tk), 1)
    col_valid = col_ids < k_cols                       # drop padded contrast columns
    lm = col_valid & (col_ids != row_ids)              # logits_mask: drop self-contrast
    lm_f = lm.astype(jnp.float32)

    if has_pair_mask:
        w = pm_ref[...].astype(jnp.float32) * lm_f     # user mask * logits_mask
    else:
        # (TA,1) anchor labels vs (1,TK) contrast labels -> (TA,TK) positives.
        w = jnp.where(al_ref[...] == cl_ref[...], lm_f, 0.0)

    # Online masked log-sum-exp; positive statistics accumulate linearly.
    s_max = jnp.max(jnp.where(col_valid, s, -jnp.inf), axis=-1, keepdims=True)
    m_prev = m_ref[...]
    m_new = jnp.maximum(m_prev, s_max)
    p = jnp.where(lm, jnp.exp(s - m_new), 0.0)
    l_ref[...] = jnp.exp(m_prev - m_new) * l_ref[...] + jnp.sum(p, axis=-1, keepdims=True)
    m_ref[...] = m_new
    ps_ref[...] = ps_ref[...] + jnp.sum(w * s, axis=-1, keepdims=True)
    pc_ref[...] = pc_ref[...] + jnp.sum(w, axis=-1, keepdims=True)

    @pl.when(j == pl.num_programs(1) - 1)
    def _finalize():
        row_valid = (i * ta + jax.lax.broadcasted_iota(jnp.int32, (ta, 1), 0)) < a_rows
        lse = m_ref[...] + jnp.log(l_ref[...])         # log sum_c exp(s)*logits_mask
        pc = pc_ref[...]
        denom = jnp.where(row_valid, pc, 1.0)          # padded rows contribute exactly 0
        mean_log_prob_pos = (ps_ref[...] - pc * lse) / denom
        loss_rows = jnp.where(row_valid, loss_scale * mean_log_prob_pos, 0.0)
        o_ref[...] = jnp.sum(loss_rows, keepdims=True)[None]     # (1,1,1) partial sum


def supcon_loss(features, labels=None, mask=None, *, temperature=0.07,
                contrast_mode='all', base_temperature=0.07,
                row_tile=256, col_tile=512):
    """Pallas TPU forward of SupConLoss; mirrors the PyTorch module semantics."""
    if features.ndim < 3:
        raise ValueError('`features` needs to be [bsz, n_views, ...], '
                         'at least 3 dimensions are required')
    if features.ndim > 3:
        features = features.reshape(features.shape[0], features.shape[1], -1)
    bsz, n_views, dim = features.shape

    if labels is not None and mask is not None:
        raise ValueError('Cannot define both `labels` and `mask`')
    has_pair_mask = mask is not None
    if labels is None and mask is None:
        labels = jnp.arange(bsz, dtype=jnp.int32)      # eye mask == each sample its own class
    if labels is not None:
        labels = jnp.asarray(labels).reshape(-1).astype(jnp.int32)
        if labels.shape[0] != bsz:
            raise ValueError('Num of labels does not match num of features')

    # contrast_feature = torch.cat(torch.unbind(features, dim=1), dim=0)
    contrast = jnp.swapaxes(features, 0, 1).reshape(n_views * bsz, dim)
    if contrast_mode == 'one':
        anchor = features[:, 0]
        anchor_count = 1
    elif contrast_mode == 'all':
        anchor = contrast
        anchor_count = n_views
    else:
        raise ValueError('Unknown mode: {}'.format(contrast_mode))

    a_rows = anchor_count * bsz          # number of anchors
    k_cols = n_views * bsz               # number of contrasts

    # Tiles: contrast dim on lanes (mult of 128), anchor dim on sublanes (mult of 8).
    ta = row_tile if a_rows > row_tile else _round_up(a_rows, 8)
    tk = col_tile if k_cols > col_tile else _round_up(k_cols, 128)
    a_pad = _round_up(a_rows, ta)
    k_pad = _round_up(k_cols, tk)

    def _pad_rows(x, n_pad):             # skip the pad copy when shapes already divide
        if x.shape[0] == n_pad:
            return x
        return jnp.zeros((n_pad,) + x.shape[1:], x.dtype).at[:x.shape[0]].set(x)

    anchor_p = _pad_rows(anchor, a_pad)        # (A_pad, D), HBM dtype kept (no pre-cast)
    contrast_p = _pad_rows(contrast, k_pad)    # (K_pad, D)

    inputs = [anchor_p, contrast_p]
    in_specs = [
        pl.BlockSpec((ta, dim), lambda i, j: (i, 0)),     # anchor feature tile
        pl.BlockSpec((tk, dim), lambda i, j: (j, 0)),     # contrast feature tile
    ]
    if has_pair_mask:
        # mask.repeat(anchor_count, contrast_count), padded, streamed as (TA, TK).
        pm = jnp.tile(jnp.asarray(mask, jnp.float32), (anchor_count, n_views))
        if a_pad == a_rows and k_pad == k_cols:
            pm_p = pm
        else:
            pm_p = jnp.zeros((a_pad, k_pad), jnp.float32).at[:a_rows, :k_cols].set(pm)
        inputs.append(pm_p)
        in_specs.append(pl.BlockSpec((ta, tk), lambda i, j: (i, j)))
    else:
        anchor_lab = labels if anchor_count == 1 else jnp.tile(labels, anchor_count)
        contrast_lab = jnp.tile(labels, n_views)
        al = jnp.full((a_pad, 1), -1, jnp.int32).at[:a_rows, 0].set(anchor_lab)
        cl = jnp.full((1, k_pad), -2, jnp.int32).at[0, :k_cols].set(contrast_lab)
        inputs += [al, cl]
        in_specs += [
            pl.BlockSpec((ta, 1), lambda i, j: (i, 0)),   # anchor labels (tiny column)
            pl.BlockSpec((1, tk), lambda i, j: (0, j)),   # contrast labels (lane-dense)
        ]

    n_row_tiles = a_pad // ta
    n_col_tiles = k_pad // tk

    kernel = functools.partial(
        _supcon_kernel,
        has_pair_mask=has_pair_mask, a_rows=a_rows, k_cols=k_cols,
        inv_temp=float(1.0 / temperature),
        loss_scale=float(-(temperature / base_temperature)),
        ta=ta, tk=tk)

    partials = pl.pallas_call(
        kernel,
        out_shape=jax.ShapeDtypeStruct((n_row_tiles, 1, 1), jnp.float32),
        grid_spec=pltpu.PrefetchScalarGridSpec(
            num_scalar_prefetch=0,
            grid=(n_row_tiles, n_col_tiles),
            in_specs=in_specs,
            out_specs=pl.BlockSpec((1, 1, 1), lambda i, j: (i, 0, 0)),
            scratch_shapes=[pltpu.VMEM((ta, 1), jnp.float32)] * 4,   # m, l, ps, pc
        ),
        compiler_params=pltpu.CompilerParams(
            dimension_semantics=("parallel", "arbitrary"),
            vmem_limit_bytes=32 * 1024 * 1024),
    )(*inputs)

    # loss.view(anchor_count, bsz).mean() == sum over all A anchor rows / A.
    # TODO(synk): anchors with zero positives give 0/0 (nan) just like PyTorch;
    # no special handling.
    return jnp.sum(partials) / a_rows


def _supcon_ref(features, labels=None, mask=None, temperature=0.07,
                contrast_mode='all', base_temperature=0.07):
    """Pure-JAX reference mirroring the PyTorch SupConLoss.forward."""
    if features.ndim > 3:
        features = features.reshape(features.shape[0], features.shape[1], -1)
    bsz, n_views, dim = features.shape
    if labels is None and mask is None:
        mask = jnp.eye(bsz, dtype=jnp.float32)
    elif labels is not None:
        labels = jnp.asarray(labels).reshape(-1, 1)
        mask = (labels == labels.T).astype(jnp.float32)
    else:
        mask = jnp.asarray(mask, jnp.float32)
    contrast_feature = jnp.swapaxes(features, 0, 1).reshape(n_views * bsz, dim)
    if contrast_mode == 'one':
        anchor_feature = features[:, 0]
        anchor_count = 1
    else:
        anchor_feature = contrast_feature
        anchor_count = n_views
    adc = (anchor_feature @ contrast_feature.T) * (1.0 / temperature)
    logits = adc - jnp.max(adc, axis=1, keepdims=True)
    mask = jnp.tile(mask, (anchor_count, n_views))
    a = anchor_count * bsz
    logits_mask = jnp.ones_like(mask).at[jnp.arange(a), jnp.arange(a)].set(0.0)
    mask = mask * logits_mask
    exp_logits = jnp.exp(logits) * logits_mask
    log_prob = logits - jnp.log(exp_logits.sum(1, keepdims=True))
    mean_log_prob_pos = (mask * log_prob).sum(1) / mask.sum(1)
    loss = -(temperature / base_temperature) * mean_log_prob_pos
    return loss.reshape(anchor_count, bsz).mean()


if __name__ == "__main__":
    key = jax.random.PRNGKey(0)
    kf, kl, km, k2f, k2l = jax.random.split(key, 5)

    bsz, n_views, dim = 16, 2, 32
    feats = jax.random.normal(kf, (bsz, n_views, dim), jnp.float32)
    feats = feats / jnp.linalg.norm(feats, axis=-1, keepdims=True)
    # Snap features to the bf16 grid so the MXU and XLA matmul paths agree to
    # rounding noise and the tight tolerance below is meaningful.
    feats = feats.astype(jnp.bfloat16).astype(jnp.float32)
    labels = jax.random.randint(kl, (bsz,), 0, 4, dtype=jnp.int32)

    checks = []
    # 1) supervised labels, contrast_mode='all'
    checks.append((supcon_loss(feats, labels=labels),
                   _supcon_ref(feats, labels=labels)))
    # 2) unsupervised SimCLR (no labels / mask)
    checks.append((supcon_loss(feats), _supcon_ref(feats)))
    # 3) explicit (asymmetric) pairwise mask
    m_rand = jax.random.bernoulli(km, 0.4, (bsz, bsz)).astype(jnp.float32)
    m_rand = jnp.maximum(m_rand, jnp.eye(bsz, dtype=jnp.float32))
    checks.append((supcon_loss(feats, mask=m_rand),
                   _supcon_ref(feats, mask=m_rand)))
    # 4) contrast_mode='one'
    checks.append((supcon_loss(feats, labels=labels, contrast_mode='one'),
                   _supcon_ref(feats, labels=labels, contrast_mode='one')))
    # 5) bigger batch with small tiles: exercises multi-tile online reduction,
    #    ragged row/col padding and the parallel row-tile axis.
    bsz2 = 80
    feats2 = jax.random.normal(k2f, (bsz2, n_views, dim), jnp.float32)
    feats2 = feats2 / jnp.linalg.norm(feats2, axis=-1, keepdims=True)
    feats2 = feats2.astype(jnp.bfloat16).astype(jnp.float32)
    labels2 = jax.random.randint(k2l, (bsz2,), 0, 10, dtype=jnp.int32)
    checks.append((supcon_loss(feats2, labels=labels2, row_tile=64, col_tile=128),
                   _supcon_ref(feats2, labels=labels2)))

    for got, ref in checks:
        got = jax.block_until_ready(got)
        assert jnp.allclose(got, ref, rtol=1e-4, atol=1e-4), (got, ref)

    print("KERNEL_OK")
</pallas_src>

<mosaic_0001>
module attributes {stable_mosaic.version = 11 : i64} {
  func.func @_supcon_kernel(%arg0: i32, %arg1: i32, %arg2: memref<32x32xf32, #tpu.memory_space<vmem>>, %arg3: memref<128x32xf32, #tpu.memory_space<vmem>>, %arg4: memref<32x1xi32, #tpu.memory_space<vmem>>, %arg5: memref<1x128xi32, #tpu.memory_space<vmem>>, %arg6: memref<1x1x1xf32, #tpu.memory_space<vmem>>, %arg7: memref<32x1xf32, #tpu.memory_space<vmem>>, %arg8: memref<32x1xf32, #tpu.memory_space<vmem>>, %arg9: memref<32x1xf32, #tpu.memory_space<vmem>>, %arg10: memref<32x1xf32, #tpu.memory_space<vmem>>) attributes {dimension_semantics = [#tpu.dimension_semantics<parallel>, #tpu.dimension_semantics<arbitrary>], iteration_bounds = array<i64: 1, 1>, scalar_prefetch = 0 : i64, scratch_operands = 4 : i64, tpu.core_type = #tpu.core_type<tc>, window_params = [{transform_indices = @transform_0, window_bounds = array<i64: 32, 32>}, {transform_indices = @transform_1, window_bounds = array<i64: 128, 32>}, {transform_indices = @transform_2, window_bounds = array<i64: 32, 1>}, {transform_indices = @transform_3, window_bounds = array<i64: 1, 128>}, {transform_indices = @transform_4, window_bounds = array<i64: 1, 1, 1>}]} {
    %c0_i32 = arith.constant 0 : i32
    %0 = arith.cmpi eq, %arg1, %c0_i32 : i32
    %1 = arith.extui %0 : i1 to i32
    %c0_i32_0 = arith.constant 0 : i32
    %2 = arith.cmpi ne, %1, %c0_i32_0 : i32
    scf.if %2 {
      %cst_35 = arith.constant 0xFF800000 : f32
      %63 = vector.broadcast %cst_35 : f32 to vector<32x1xf32>
      %c0_36 = arith.constant 0 : index
      %c0_37 = arith.constant 0 : index
      %64 = vector.load %arg7[%c0_36, %c0_37] : memref<32x1xf32, #tpu.memory_space<vmem>>, vector<32x1xf32>
      tpu.vector_store %arg7[%c0_36, %c0_37], %63 {strides = array<i32>} : memref<32x1xf32, #tpu.memory_space<vmem>>, vector<32x1xf32>,
      %cst_38 = arith.constant 0.000000e+00 : f32
      %65 = vector.broadcast %cst_38 : f32 to vector<32x1xf32>
      %c0_39 = arith.constant 0 : index
      %c0_40 = arith.constant 0 : index
      %66 = vector.load %arg8[%c0_39, %c0_40] : memref<32x1xf32, #tpu.memory_space<vmem>>, vector<32x1xf32>
      tpu.vector_store %arg8[%c0_39, %c0_40], %65 {strides = array<i32>} : memref<32x1xf32, #tpu.memory_space<vmem>>, vector<32x1xf32>,
      %cst_41 = arith.constant 0.000000e+00 : f32
      %67 = vector.broadcast %cst_41 : f32 to vector<32x1xf32>
      %c0_42 = arith.constant 0 : index
      %c0_43 = arith.constant 0 : index
      %68 = vector.load %arg9[%c0_42, %c0_43] : memref<32x1xf32, #tpu.memory_space<vmem>>, vector<32x1xf32>
      tpu.vector_store %arg9[%c0_42, %c0_43], %67 {strides = array<i32>} : memref<32x1xf32, #tpu.memory_space<vmem>>, vector<32x1xf32>,
      %cst_44 = arith.constant 0.000000e+00 : f32
      %69 = vector.broadcast %cst_44 : f32 to vector<32x1xf32>
      %c0_45 = arith.constant 0 : index
      %c0_46 = arith.constant 0 : index
      %70 = vector.load %arg10[%c0_45, %c0_46] : memref<32x1xf32, #tpu.memory_space<vmem>>, vector<32x1xf32>
      tpu.vector_store %arg10[%c0_45, %c0_46], %69 {strides = array<i32>} : memref<32x1xf32, #tpu.memory_space<vmem>>, vector<32x1xf32>,
    } else {
    }
    %c0 = arith.constant 0 : index
    %c0_1 = arith.constant 0 : index
    %3 = vector.load %arg2[%c0, %c0_1] : memref<32x32xf32, #tpu.memory_space<vmem>>, vector<32x32xf32>
    %c0_2 = arith.constant 0 : index
    %c0_3 = arith.constant 0 : index
    %4 = vector.load %arg3[%c0_2, %c0_3] : memref<128x32xf32, #tpu.memory_space<vmem>>, vector<128x32xf32>
    %cst = arith.constant dense<0.000000e+00> : vector<32x128xf32>
    %5 = tpu.matmul %3, %4, %cst {dimension_numbers = #tpu.dot_dimension_numbers<[1], [1], [0], [0], [0, 0, 1, 0], [], []>} : vector<32x32xf32>, vector<128x32xf32>, vector<32x128xf32> -> vector<32x128xf32>
    %cst_4 = arith.constant 14.2857141 : f32
    %6 = vector.broadcast %cst_4 : f32 to vector<32x128xf32>
    %7 = arith.mulf %5, %6 : vector<32x128xf32>
    %c32_i32 = arith.constant 32 : i32
    %8 = arith.muli %arg0, %c32_i32 : i32
    %9 = tpu.iota {dimensions = array<i32: 0>} : vector<32x128xi32>
    %10 = vector.broadcast %8 : i32 to vector<32x128xi32>
    %11 = arith.addi %10, %9 : vector<32x128xi32>
    %c128_i32 = arith.constant 128 : i32
    %12 = arith.muli %arg1, %c128_i32 : i32
    %13 = tpu.iota {dimensions = array<i32: 1>} : vector<32x128xi32>
    %14 = vector.broadcast %12 : i32 to vector<32x128xi32>
    %15 = arith.addi %14, %13 : vector<32x128xi32>
    %c32_i32_5 = arith.constant 32 : i32
    %16 = vector.broadcast %c32_i32_5 : i32 to vector<32x128xi32>
    %17 = arith.cmpi slt, %15, %16 : vector<32x128xi32>
    %18 = arith.cmpi ne, %15, %11 : vector<32x128xi32>
    %19 = arith.andi %17, %18 : vector<32x128xi1>
    %20 = arith.extui %19 : vector<32x128xi1> to vector<32x128xi32>
    %21 = arith.sitofp %20 : vector<32x128xi32> to vector<32x128xf32>
    %c0_6 = arith.constant 0 : index
    %c0_7 = arith.constant 0 : index
    %22 = vector.load %arg4[%c0_6, %c0_7] : memref<32x1xi32, #tpu.memory_space<vmem>>, vector<32x1xi32>
    %c0_8 = arith.constant 0 : index
    %c0_9 = arith.constant 0 : index
    %23 = vector.load %arg5[%c0_8, %c0_9] : memref<1x128xi32, #tpu.memory_space<vmem>>, vector<1x128xi32>
    %24 = vector.broadcast %22 : vector<32x1xi32> to vector<32x128xi32>
    %25 = vector.broadcast %23 : vector<1x128xi32> to vector<32x128xi32>
    %26 = arith.cmpi eq, %24, %25 : vector<32x128xi32>
    %cst_10 = arith.constant 0.000000e+00 : f32
    %27 = vector.broadcast %cst_10 : f32 to vector<32x128xf32>
    %28 = arith.select %26, %21, %27 : vector<32x128xi1>, vector<32x128xf32>
    %cst_11 = arith.constant 0xFF800000 : f32
    %29 = vector.broadcast %cst_11 : f32 to vector<32x128xf32>
    %30 = arith.select %17, %7, %29 : vector<32x128xi1>, vector<32x128xf32>
    %cst_12 = arith.constant dense<0xFF800000> : vector<32xf32>
    %31 = vector.multi_reduction <maximumf>, %30, %cst_12 [1] : vector<32x128xf32> to vector<32xf32>
    %32 = vector.shape_cast %31 : vector<32xf32> to vector<32x1xf32>
    %c0_13 = arith.constant 0 : index
    %c0_14 = arith.constant 0 : index
    %33 = vector.load %arg7[%c0_13, %c0_14] : memref<32x1xf32, #tpu.memory_space<vmem>>, vector<32x1xf32>
    %34 = arith.maximumf %33, %32 : vector<32x1xf32>
    %35 = vector.broadcast %34 : vector<32x1xf32> to vector<32x128xf32>
    %36 = arith.subf %7, %35 : vector<32x128xf32>
    %37 = math.exp %36 : vector<32x128xf32>
    %cst_15 = arith.constant 0.000000e+00 : f32
    %38 = vector.broadcast %cst_15 : f32 to vector<32x128xf32>
    %39 = arith.select %19, %37, %38 : vector<32x128xi1>, vector<32x128xf32>
    %40 = arith.subf %33, %34 : vector<32x1xf32>
    %41 = math.exp %40 : vector<32x1xf32>
    %c0_16 = arith.constant 0 : index
    %c0_17 = arith.constant 0 : index
    %42 = vector.load %arg8[%c0_16, %c0_17] : memref<32x1xf32, #tpu.memory_space<vmem>>, vector<32x1xf32>
    %43 = arith.mulf %41, %42 : vector<32x1xf32>
    %cst_18 = arith.constant dense<0.000000e+00> : vector<32xf32>
    %44 = vector.multi_reduction <add>, %39, %cst_18 [1] : vector<32x128xf32> to vector<32xf32>
    %45 = vector.shape_cast %44 : vector<32xf32> to vector<32x1xf32>
    %46 = arith.addf %43, %45 : vector<32x1xf32>
    %c0_19 = arith.constant 0 : index
    %c0_20 = arith.constant 0 : index
    %47 = vector.load %arg8[%c0_19, %c0_20] : memref<32x1xf32, #tpu.memory_space<vmem>>, vector<32x1xf32>
    tpu.vector_store %arg8[%c0_19, %c0_20], %46 {strides = array<i32>} : memref<32x1xf32, #tpu.memory_space<vmem>>, vector<32x1xf32>,
    %c0_21 = arith.constant 0 : index
    %c0_22 = arith.constant 0 : index
    %48 = vector.load %arg7[%c0_21, %c0_22] : memref<32x1xf32, #tpu.memory_space<vmem>>, vector<32x1xf32>
    tpu.vector_store %arg7[%c0_21, %c0_22], %34 {strides = array<i32>} : memref<32x1xf32, #tpu.memory_space<vmem>>, vector<32x1xf32>,
    %c0_23 = arith.constant 0 : index
    %c0_24 = arith.constant 0 : index
    %49 = vector.load %arg9[%c0_23, %c0_24] : memref<32x1xf32, #tpu.memory_space<vmem>>, vector<32x1xf32>
    %50 = arith.mulf %28, %7 : vector<32x128xf32>
    %cst_25 = arith.constant dense<0.000000e+00> : vector<32xf32>
    %51 = vector.multi_reduction <add>, %50, %cst_25 [1] : vector<32x128xf32> to vector<32xf32>
    %52 = vector.shape_cast %51 : vector<32xf32> to vector<32x1xf32>
    %53 = arith.addf %49, %52 : vector<32x1xf32>
    %c0_26 = arith.constant 0 : index
    %c0_27 = arith.constant 0 : index
    %54 = vector.load %arg9[%c0_26, %c0_27] : memref<32x1xf32, #tpu.memory_space<vmem>>, vector<32x1xf32>
    tpu.vector_store %arg9[%c0_26, %c0_27], %53 {strides = array<i32>} : memref<32x1xf32, #tpu.memory_space<vmem>>, vector<32x1xf32>,
    %c0_28 = arith.constant 0 : index
    %c0_29 = arith.constant 0 : index
    %55 = vector.load %arg10[%c0_28, %c0_29] : memref<32x1xf32, #tpu.memory_space<vmem>>, vector<32x1xf32>
    %cst_30 = arith.constant dense<0.000000e+00> : vector<32xf32>
    %56 = vector.multi_reduction <add>, %28, %cst_30 [1] : vector<32x128xf32> to vector<32xf32>
    %57 = vector.shape_cast %56 : vector<32xf32> to vector<32x1xf32>
    %58 = arith.addf %55, %57 : vector<32x1xf32>
    %c0_31 = arith.constant 0 : index
    %c0_32 = arith.constant 0 : index
    %59 = vector.load %arg10[%c0_31, %c0_32] : memref<32x1xf32, #tpu.memory_space<vmem>>, vector<32x1xf32>
    tpu.vector_store %arg10[%c0_31, %c0_32], %58 {strides = array<i32>} : memref<32x1xf32, #tpu.memory_space<vmem>>, vector<32x1xf32>,
    %c0_i32_33 = arith.constant 0 : i32
    %60 = arith.cmpi eq, %arg1, %c0_i32_33 : i32
    %61 = arith.extui %60 : i1 to i32
    %c0_i32_34 = arith.constant 0 : i32
    %62 = arith.cmpi ne, %61, %c0_i32_34 : i32
    scf.if %62 {
      %c32_i32_35 = arith.constant 32 : i32
      %63 = arith.muli %arg0, %c32_i32_35 : i32
      %64 = tpu.iota {dimensions = array<i32: 0>} : vector<32x1xi32>
      %65 = vector.broadcast %63 : i32 to vector<32x1xi32>
      %66 = arith.addi %65, %64 : vector<32x1xi32>
      %c32_i32_36 = arith.constant 32 : i32
      %67 = vector.broadcast %c32_i32_36 : i32 to vector<32x1xi32>
      %68 = arith.cmpi slt, %66, %67 : vector<32x1xi32>
      %c0_37 = arith.constant 0 : index
      %c0_38 = arith.constant 0 : index
      %69 = vector.load %arg7[%c0_37, %c0_38] : memref<32x1xf32, #tpu.memory_space<vmem>>, vector<32x1xf32>
      %c0_39 = arith.constant 0 : index
      %c0_40 = arith.constant 0 : index
      %70 = vector.load %arg8[%c0_39, %c0_40] : memref<32x1xf32, #tpu.memory_space<vmem>>, vector<32x1xf32>
      %71 = math.log %70 : vector<32x1xf32>
      %72 = arith.addf %69, %71 : vector<32x1xf32>
      %c0_41 = arith.constant 0 : index
      %c0_42 = arith.constant 0 : index
      %73 = vector.load %arg10[%c0_41, %c0_42] : memref<32x1xf32, #tpu.memory_space<vmem>>, vector<32x1xf32>
      %cst_43 = arith.constant 1.000000e+00 : f32
      %74 = vector.broadcast %cst_43 : f32 to vector<32x1xf32>
      %75 = arith.select %68, %73, %74 : vector<32x1xi1>, vector<32x1xf32>
      %c0_44 = arith.constant 0 : index
      %c0_45 = arith.constant 0 : index
      %76 = vector.load %arg9[%c0_44, %c0_45] : memref<32x1xf32, #tpu.memory_space<vmem>>, vector<32x1xf32>
      %77 = arith.mulf %73, %72 : vector<32x1xf32>
      %78 = arith.subf %76, %77 : vector<32x1xf32>
      %79 = arith.divf %78, %75 : vector<32x1xf32>
      %cst_46 = arith.constant -1.000000e+00 : f32
      %80 = vector.broadcast %cst_46 : f32 to vector<32x1xf32>
      %81 = arith.mulf %80, %79 : vector<32x1xf32>
      %cst_47 = arith.constant 0.000000e+00 : f32
      %82 = vector.broadcast %cst_47 : f32 to vector<32x1xf32>
      %83 = arith.select %68, %81, %82 : vector<32x1xi1>, vector<32x1xf32>
      %84 = vector.shape_cast %83 : vector<32x1xf32> to vector<1x32x1xf32>
      %cst_48 = arith.constant dense<0.000000e+00> : vector<1xf32>
      %85 = vector.multi_reduction <add>, %84, %cst_48 [1, 2] : vector<1x32x1xf32> to vector<1xf32>
      %86 = vector.shape_cast %85 : vector<1xf32> to vector<1x1x1xf32>
      %87 = vector.extract %86[0, 0, 0] : f32 from vector<1x1x1xf32>
      %88 = vector.broadcast %87 : f32 to vector<1x1xf32>
      %89 = vector.shape_cast %88 : vector<1x1xf32> to vector<1x1x1xf32>
      %c0_49 = arith.constant 0 : index
      %c0_50 = arith.constant 0 : index
      %c0_51 = arith.constant 0 : index
      %90 = vector.load %arg6[%c0_49, %c0_50, %c0_51] : memref<1x1x1xf32, #tpu.memory_space<vmem>>, vector<1x1x1xf32>
      tpu.vector_store %arg6[%c0_49, %c0_50, %c0_51], %89 {strides = array<i32>} : memref<1x1x1xf32, #tpu.memory_space<vmem>>, vector<1x1x1xf32>,
    } else {
    }
    return
  }
  func.func @transform_0(%arg0: i32, %arg1: i32) -> (i32, i32) {
    %c0_i32 = arith.constant 0 : i32
    %c0_i32_0 = arith.constant 0 : i32
    return %arg0, %c0_i32 : i32, i32
  }
  func.func @transform_1(%arg0: i32, %arg1: i32) -> (i32, i32) {
    %c0_i32 = arith.constant 0 : i32
    %c0_i32_0 = arith.constant 0 : i32
    return %arg1, %c0_i32 : i32, i32
  }
  func.func @transform_2(%arg0: i32, %arg1: i32) -> (i32, i32) {
    %c0_i32 = arith.constant 0 : i32
    %c0_i32_0 = arith.constant 0 : i32
    return %arg0, %c0_i32 : i32, i32
  }
  func.func @transform_3(%arg0: i32, %arg1: i32) -> (i32, i32) {
    %c0_i32 = arith.constant 0 : i32
    %c0_i32_0 = arith.constant 0 : i32
    return %c0_i32, %arg1 : i32, i32
  }
  func.func @transform_4(%arg0: i32, %arg1: i32) -> (i32, i32, i32) {
    %c0_i32 = arith.constant 0 : i32
    %c0_i32_0 = arith.constant 0 : i32
    %c0_i32_1 = arith.constant 0 : i32
    return %arg0, %c0_i32, %c0_i32_0 : i32, i32, i32
  }
}

</mosaic_0001>

<llo_original>
// kernel: tpu_custom_call.1
$region0: #{tpu_custom_call.1}
  #allocation0 [shape = 'u32[]', space=smem, size = 0x4, offset = 0x4, fixed_abs, tag = 'smem constant byte address 0x4 - core index']
  #allocation1 [shape = 'u32[144,128]{1,0:T(1,128)}', space=vmem, size = 0x12000, scoped, tag = 'internal scratch']
  #allocation2 [shape = 'f32[32,1]{1,0:T(8,128)}', space=vmem, size = 0x4000, scoped, tag = 'scratch operand']
  #allocation3 [shape = 'f32[32,1]{1,0:T(8,128)}', space=vmem, size = 0x4000, scoped, tag = 'scratch operand']
  #allocation4 [shape = 'f32[32,1]{1,0:T(8,128)}', space=vmem, size = 0x4000, scoped, tag = 'scratch operand']
  #allocation5 [shape = 'f32[32,1]{1,0:T(8,128)}', space=vmem, size = 0x4000, scoped, tag = 'scratch operand']
  %s0 = inlined_call_operand.vmem [shape: f32[32,32], index: 0, kind: input, shape index: {}]
  %s1 = inlined_call_operand.vmem [shape: f32[128,32], index: 1, kind: input, shape index: {}]
  %s2 = inlined_call_operand.vmem [shape: s32[32,1], index: 2, kind: input, shape index: {}]
  %s3 = inlined_call_operand.vmem [shape: s32[1,128], index: 3, kind: input, shape index: {}]
  %s4 = inlined_call_operand.hbm [shape: f32[1,1,1], index: 4, kind: output, shape index: {}]
  %s5 = sld [smem:[#allocation0]]
  $region34: #{tpu_custom_call.1} parent=0
    _
  %s7 = ssub.s32 1, %s5
  %s8 = scalar_select 0, %s7, %s5
  $region1: #{tpu_custom_call.1} parent=0
    #allocation6 [shape = 'u8[512]{0}', space=vmem, size = 0x400, scoped, tag = 'output window, operand 0, single buffered']
    #allocation7 [shape = 's32[1]{0}', space=sflag, size = 0x4, scoped, tag = 'scoped memory for tpu_custom_call.1']
    %9 = vsyncpa [#allocation7], 0
    // Predicated region
    $region2: #{tpu_custom_call.1} parent=1 // pred_check
      _
    $region3: #{tpu_custom_call.1} parent=1 // pred_check_branch
      %11 = sbr.rel (0) target = $region5
    $region4: #{tpu_custom_call.1} parent=1 // pred_region
      _
    $region5: #{tpu_custom_call.1} parent=1 // pred_fallthru
      _
    // Predicated region
    $region6: #{tpu_custom_call.1} parent=1 // pred_check
      _
    $region7: #{tpu_custom_call.1} parent=1 // pred_check_branch
      %13 = sbr.rel (0) target = $region9
    $region8: #{tpu_custom_call.1} parent=1 // pred_region
      _
    $region9: #{tpu_custom_call.1} parent=1 // pred_fallthru
      _
    // Predicated region
    $region10: #{tpu_custom_call.1} parent=1 // pred_check
      _
    $region11: #{tpu_custom_call.1} parent=1 // pred_check_branch
      %15 = sbr.rel (0) target = $region13
    $region12: #{tpu_custom_call.1} parent=1 // pred_region
      _
    $region13: #{tpu_custom_call.1} parent=1 // pred_fallthru
      _
    // Predicated region
    $region14: #{tpu_custom_call.1} parent=1 // pred_check
      _
    $region15: #{tpu_custom_call.1} parent=1 // pred_check_branch
      %17 = sbr.rel (0) target = $region17
    $region16: #{tpu_custom_call.1} parent=1 // pred_region
      _
    $region17: #{tpu_custom_call.1} parent=1 // pred_fallthru
      _
    %p18 = scmp.eq.s32.totalorder 0, 0
    // Predicated region
    $region18: #{tpu_custom_call.1} parent=1 // pred_check
      %p19 = pneg %p18
    $region19: #{tpu_custom_call.1} parent=1 // pred_check_branch
      %21 = sbr.rel (%p19) target = $region21
    $region20: #{tpu_custom_call.1} parent=1 // pred_region
      %vm22 = vcmask 7168
      %23 = vst.msk [vmem:[#allocation2] sm:$0xff] %vm22, -inf
      %24 = vst.msk [vmem:[#allocation2 + $0x8] sm:$0xff] %vm22, -inf
      %25 = vst.msk [vmem:[#allocation2 + $0x10] sm:$0xff] %vm22, -inf
      %26 = vst.msk [vmem:[#allocation2 + $0x18] sm:$0xff] %vm22, -inf
      %27 = vst.msk [vmem:[#allocation3] sm:$0xff] %vm22, 0.0
      %28 = vst.msk [vmem:[#allocation3 + $0x8] sm:$0xff] %vm22, 0.0
      %29 = vst.msk [vmem:[#allocation3 + $0x10] sm:$0xff] %vm22, 0.0
      %30 = vst.msk [vmem:[#allocation3 + $0x18] sm:$0xff] %vm22, 0.0
      %31 = vst.msk [vmem:[#allocation4] sm:$0xff] %vm22, 0.0
      %32 = vst.msk [vmem:[#allocation4 + $0x8] sm:$0xff] %vm22, 0.0
      %33 = vst.msk [vmem:[#allocation4 + $0x10] sm:$0xff] %vm22, 0.0
      %34 = vst.msk [vmem:[#allocation4 + $0x18] sm:$0xff] %vm22, 0.0
      %35 = vst.msk [vmem:[#allocation5] sm:$0xff] %vm22, 0.0
      %36 = vst.msk [vmem:[#allocation5 + $0x8] sm:$0xff] %vm22, 0.0
      %37 = vst.msk [vmem:[#allocation5 + $0x10] sm:$0xff] %vm22, 0.0
      %38 = vst.msk [vmem:[#allocation5 + $0x18] sm:$0xff] %vm22, 0.0
    $region21: #{tpu_custom_call.1} parent=1 // pred_fallthru
      _
    %v39 = vld [vmem:[%s0] sm:$0xff]
    %v40 = vld [vmem:[%s0 + $0x8] sm:$0xff]
    %v41 = vld [vmem:[%s0 + $0x10] sm:$0xff]
    %v42 = vld [vmem:[%s0 + $0x18] sm:$0xff]
    %v43 = vld [vmem:[%s1] sm:$0xff]
    %v44 = vld [vmem:[%s1 + $0x8] sm:$0xff]
    %v45 = vld [vmem:[%s1 + $0x10] sm:$0xff]
    %v46 = vld [vmem:[%s1 + $0x18] sm:$0xff]
    %v47 = vld [vmem:[%s1 + $0x20] sm:$0xff]
    %v48 = vld [vmem:[%s1 + $0x28] sm:$0xff]
    %v49 = vld [vmem:[%s1 + $0x30] sm:$0xff]
    %v50 = vld [vmem:[%s1 + $0x38] sm:$0xff]
    %v51 = vld [vmem:[%s1 + $0x40] sm:$0xff]
    %v52 = vld [vmem:[%s1 + $0x48] sm:$0xff]
    %v53 = vld [vmem:[%s1 + $0x50] sm:$0xff]
    %v54 = vld [vmem:[%s1 + $0x58] sm:$0xff]
    %v55 = vld [vmem:[%s1 + $0x60] sm:$0xff]
    %v56 = vld [vmem:[%s1 + $0x68] sm:$0xff]
    %v57 = vld [vmem:[%s1 + $0x70] sm:$0xff]
    %v58 = vld [vmem:[%s1 + $0x78] sm:$0xff]
    %vm59 = vcmask 261120
    %v61 = vsel %vm59, %v39, 0
    %v64 = vsel %vm59, %v40, 0
    %v67 = vsel %vm59, %v41, 0
    %v70 = vsel %vm59, %v42, 0
    %v73 = vsel %vm59, %v43, 0
    %v76 = vsel %vm59, %v44, 0
    %v79 = vsel %vm59, %v45, 0
    %v82 = vsel %vm59, %v46, 0
    %v85 = vsel %vm59, %v47, 0
    %v88 = vsel %vm59, %v48, 0
    %v91 = vsel %vm59, %v49, 0
    %v94 = vsel %vm59, %v50, 0
    %v97 = vsel %vm59, %v51, 0
    %v100 = vsel %vm59, %v52, 0
    %v103 = vsel %vm59, %v53, 0
    %v106 = vsel %vm59, %v54, 0
    %v109 = vsel %vm59, %v55, 0
    %v112 = vsel %vm59, %v56, 0
    %v115 = vsel %vm59, %v57, 0
    %v118 = vsel %vm59, %v58, 0
    %120 = vmatprep.subr.mxu0 0.0
    %121 = vmatpush1.xpose.msra.mxu0 %v73
    %122 = vmatprep.subr.mxu0 0.0
    %123 = vmatpush1.xpose.msra.mxu0 %v76
    %124 = vmatprep.subr.mxu0 0.0
    %125 = vmatpush1.xpose.msra.mxu0 %v79
    %126 = vmatprep.subr.mxu0 0.0
    %127 = vmatpush1.xpose.msra.mxu0 %v82
    %128 = vmatprep.subr.mxu0 0.0
    %129 = vmatpush1.xpose.msra.mxu0 %v85
    %130 = vmatprep.subr.mxu0 0.0
    %131 = vmatpush1.xpose.msra.mxu0 %v88
    %132 = vmatprep.subr.mxu0 0.0
    %133 = vmatpush1.xpose.msra.mxu0 %v91
    %134 = vmatprep.subr.mxu0 0.0
    %135 = vmatpush1.xpose.msra.mxu0 %v94
    %136 = vmatprep.subr.mxu0 0.0
    %137 = vmatpush1.xpose.msra.mxu0 %v97
    %138 = vmatprep.subr.mxu0 0.0
    %139 = vmatpush1.xpose.msra.mxu0 %v100
    %140 = vmatprep.subr.mxu0 0.0
    %141 = vmatpush1.xpose.msra.mxu0 %v103
    %142 = vmatprep.subr.mxu0 0.0
    %143 = vmatpush1.xpose.msra.mxu0 %v106
    %144 = vmatprep.subr.mxu0 0.0
    %145 = vmatpush1.xpose.msra.mxu0 %v109
    %146 = vmatprep.subr.mxu0 0.0
    %147 = vmatpush1.xpose.msra.mxu0 %v112
    %148 = vmatprep.subr.mxu0 0.0
    %149 = vmatpush1.xpose.msra.mxu0 %v115
    %150 = vmatprep.subr.mxu0 0.0
    %151 = vmatpush1.xpose.msra.mxu0 %v118
    %152 = vmatprep.subr.mxu0 0.0
    %153 = vmatpush1.xpose.msra.mxu0 0.0
    %154 = vmatprep.subr.mxu0 0.0
    %155 = vmatpush1.xpose.msra.mxu0 0.0
    %156 = vmatprep.subr.mxu0 0.0
    %157 = vmatpush1.xpose.msra.mxu0 0.0
    %158 = vmatprep.subr.mxu0 0.0
    %159 = vmatpush1.xpose.msra.mxu0 0.0
    %160 = vmatprep.subr.mxu0 0.0
    %161 = vmatpush1.xpose.msra.mxu0 0.0
    %162 = vmatprep.subr.mxu0 0.0
    %163 = vmatpush1.xpose.msra.mxu0 0.0
    %164 = vmatprep.subr.mxu0 0.0
    %165 = vmatpush1.xpose.msra.mxu0 0.0
    %166 = vmatprep.subr.mxu0 0.0
    %167 = vmatpush1.xpose.msra.mxu0 0.0
    %168 = vmatprep.subr.mxu0 0.0
    %169 = vmatpush1.xpose.msra.mxu0 0.0
    %170 = vmatprep.subr.mxu0 0.0
    %171 = vmatpush1.xpose.msra.mxu0 0.0
    %172 = vmatprep.subr.mxu0 0.0
    %173 = vmatpush1.xpose.msra.mxu0 0.0
    %174 = vmatprep.subr.mxu0 0.0
    %175 = vmatpush1.xpose.msra.mxu0 0.0
    %176 = vmatprep.subr.mxu0 0.0
    %177 = vmatpush1.xpose.msra.mxu0 0.0
    %178 = vmatprep.subr.mxu0 0.0
    %179 = vmatpush1.xpose.msra.mxu0 0.0
    %180 = vmatprep.subr.mxu0 0.0
    %181 = vmatpush1.xpose.msra.mxu0 0.0
    %182 = vmatprep.subr.mxu0 0.0
    %183 = vmatpush1.xpose.msra.mxu0 0.0
    %184 = vmatprep.mubr.f32.mxu0 0.0
    %185 = vmatmul.mubr.f32.gmra.mrb[0].mxu0 %v61
    %v186 = vpop.f32.mrb[0].mxu0
    %v187 = vadd.f32 0.0, %v186
    %v188 = vpop.f32.mrb[0].mxu0
    %189 = vmatprep.mubr.f32.mxu0 0.0
    %190 = vmatmul.mubr.f32.gmra.mrb[0].mxu0 %v64
    %v191 = vpop.f32.mrb[0].mxu0
    %v192 = vadd.f32 0.0, %v191
    %v193 = vpop.f32.mrb[0].mxu0
    %194 = vmatprep.mubr.f32.mxu0 0.0
    %195 = vmatmul.mubr.f32.gmra.mrb[0].mxu0 %v67
    %v196 = vpop.f32.mrb[0].mxu0
    %v197 = vadd.f32 0.0, %v196
    %v198 = vpop.f32.mrb[0].mxu0
    %199 = vmatprep.mubr.f32.mxu0 0.0
    %200 = vmatmul.mubr.f32.gmra.mrb[0].mxu0 %v70
    %v201 = vpop.f32.mrb[0].mxu0
    %v202 = vadd.f32 0.0, %v201
    %v203 = vpop.f32.mrb[0].mxu0
    %204 = vdwg.mxu0
    %v205 = vmul.f32 %v187, 14.285714
    %v206 = vmul.f32 %v192, 14.285714
    %v207 = vmul.f32 %v197, 14.285714
    %v208 = vmul.f32 %v202, 14.285714
    %s209 = smul.u32 0, 32
    %v210 = vlaneseq
    %v211 = vshrl.u32 %v210, 7
    %v212 = vadd.s32 %v211, 8
    %v213 = vadd.s32 %v211, 16
    %v214 = vadd.s32 %v211, 24
    %v215 = vstv %s209
    %v216 = vadd.s32 %v215, %v211
    %v217 = vadd.s32 %v215, %v212
    %v218 = vadd.s32 %v215, %v213
    %v219 = vadd.s32 %v215, %v214
    %s220 = smul.u32 0, 128
    %v221 = vlaneseq
    %v222 = vand.u32 %v221, 127
    %v223 = vstv %s220
    %v224 = vadd.s32 %v223, %v222
    %vm225 = vcmp.lt.s32.totalorder %v224, 32
    %vm226 = vcmp.ne.s32.totalorder %v224, %v216
    %vm227 = vcmp.ne.s32.totalorder %v224, %v217
    %vm228 = vcmp.ne.s32.totalorder %v224, %v218
    %vm229 = vcmp.ne.s32.totalorder %v224, %v219
    %vm230 = vmand %vm225, %vm226
    %vm231 = vmand %vm225, %vm227
    %vm232 = vmand %vm225, %vm228
    %vm233 = vmand %vm225, %vm229
    %v234 = vsel %vm230, 1, 0
    %v235 = vsel %vm231, 1, 0
    %v236 = vsel %vm232, 1, 0
    %v237 = vsel %vm233, 1, 0
    %v238 = vcvt.s32.f32 %v234
    %v239 = vcvt.s32.f32 %v235
    %v240 = vcvt.s32.f32 %v236
    %v241 = vcvt.s32.f32 %v237
    %v242 = vld [vmem:[%s2] sm:$0xff]
    %v243 = vld [vmem:[%s2 + $0x8] sm:$0xff]
    %v244 = vld [vmem:[%s2 + $0x10] sm:$0xff]
    %v245 = vld [vmem:[%s2 + $0x18] sm:$0xff]
    %v246 = vld [vmem:[%s3] sm:$0x1]
    %247 = vset.pattern.permute.xlu0 0
    %248 = vperm.xlu0 %247, %v242
    %v249 = vpop.permute.xlu0 %248
    %250 = vset.pattern.permute.xlu0 0
    %251 = vperm.xlu0 %250, %v243
    %v252 = vpop.permute.xlu0 %251
    %253 = vset.pattern.permute.xlu0 0
    %254 = vperm.xlu0 %253, %v244
    %v255 = vpop.permute.xlu0 %254
    %256 = vset.pattern.permute.xlu0 0
    %257 = vperm.xlu0 %256, %v245
    %v258 = vpop.permute.xlu0 %257
    %v259 = vlaneseq
    %v260 = vshrl.u32 %v259, 7
    %v261 = vsub.s32 0, %v260
    %v262 = vrot.slane %v246, %v261
    %vm263 = vcmp.eq.s32.totalorder %v249, %v262
    %vm264 = vcmp.eq.s32.totalorder %v252, %v262
    %vm265 = vcmp.eq.s32.totalorder %v255, %v262
    %vm266 = vcmp.eq.s32.totalorder %v258, %v262
    %v267 = vsel %vm263, %v238, 0.0
    %v268 = vsel %vm264, %v239, 0.0
    %v269 = vsel %vm265, %v240, 0.0
    %v270 = vsel %vm266, %v241, 0.0
    %v271 = vsel %vm225, %v205, -inf
    %v272 = vsel %vm225, %v206, -inf
    %v273 = vsel %vm225, %v207, -inf
    %v274 = vsel %vm225, %v208, -inf
    %275 = vmax.xlane.f32.xlu0 %v271
    %v276 = vpop.xlane.xlu0 %275
    %277 = vmax.xlane.f32.xlu0 %v272
    %v278 = vpop.xlane.xlu0 %277
    %279 = vmax.xlane.f32.xlu0 %v273
    %v280 = vpop.xlane.xlu0 %279
    %281 = vmax.xlane.f32.xlu0 %v274
    %v282 = vpop.xlane.xlu0 %281
    %v283 = vld [vmem:[#allocation2] sm:$0xff]
    %v284 = vld [vmem:[#allocation2 + $0x8] sm:$0xff]
    %v285 = vld [vmem:[#allocation2 + $0x10] sm:$0xff]
    %v286 = vld [vmem:[#allocation2 + $0x18] sm:$0xff]
    %v287 = vmax.f32 %v283, %v276
    %v288 = vmax.f32 %v284, %v278
    %v289 = vmax.f32 %v285, %v280
    %v290 = vmax.f32 %v286, %v282
    %292 = vset.pattern.permute.xlu0 0
    %293 = vperm.xlu0 %292, %v287
    %v294 = vpop.permute.xlu0 %293
    %297 = vset.pattern.permute.xlu0 0
    %298 = vperm.xlu0 %297, %v288
    %v299 = vpop.permute.xlu0 %298
    %302 = vset.pattern.permute.xlu0 0
    %303 = vperm.xlu0 %302, %v289
    %v304 = vpop.permute.xlu0 %303
    %307 = vset.pattern.permute.xlu0 0
    %308 = vperm.xlu0 %307, %v290
    %v309 = vpop.permute.xlu0 %308
    %v311 = vsub.f32 %v205, %v294
    %v312 = vsub.f32 %v206, %v299
    %v313 = vsub.f32 %v207, %v304
    %v314 = vsub.f32 %v208, %v309
    %v315 = vmul.f32 %v311, 1.442695
    %v316 = vpow.pop %v315
    %v317 = vmul.f32 %v312, 1.442695
    %v318 = vpow.pop %v317
    %v319 = vmul.f32 %v313, 1.442695
    %v320 = vpow.pop %v319
    %v321 = vmul.f32 %v314, 1.442695
    %v322 = vpow.pop %v321
    %v323 = vsel %vm230, %v316, 0.0
    %v324 = vsel %vm231, %v318, 0.0
    %v325 = vsel %vm232, %v320, 0.0
    %v326 = vsel %vm233, %v322, 0.0
    %v327 = vsub.f32 %v283, %v287
    %v328 = vsub.f32 %v284, %v288
    %v329 = vsub.f32 %v285, %v289
    %v330 = vsub.f32 %v286, %v290
    %v331 = vmul.f32 %v327, 1.442695
    %v332 = vpow.pop %v331
    %v333 = vmul.f32 %v328, 1.442695
    %v334 = vpow.pop %v333
    %v335 = vmul.f32 %v329, 1.442695
    %v336 = vpow.pop %v335
    %v337 = vmul.f32 %v330, 1.442695
    %v338 = vpow.pop %v337
    %v339 = vld [vmem:[#allocation3] sm:$0xff]
    %v340 = vld [vmem:[#allocation3 + $0x8] sm:$0xff]
    %v341 = vld [vmem:[#allocation3 + $0x10] sm:$0xff]
    %v342 = vld [vmem:[#allocation3 + $0x18] sm:$0xff]
    %v343 = vmul.f32 %v332, %v339
    %v344 = vmul.f32 %v334, %v340
    %v345 = vmul.f32 %v336, %v341
    %v346 = vmul.f32 %v338, %v342
    %347 = vadd.xlane.f32.xlu0 %v323
    %v348 = vpop.xlane.xlu0 %347
    %349 = vadd.xlane.f32.xlu0 %v324
    %v350 = vpop.xlane.xlu0 %349
    %351 = vadd.xlane.f32.xlu0 %v325
    %v352 = vpop.xlane.xlu0 %351
    %353 = vadd.xlane.f32.xlu0 %v326
    %v354 = vpop.xlane.xlu0 %353
    %v355 = vadd.f32 %v343, %v348
    %v356 = vadd.f32 %v344, %v350
    %v357 = vadd.f32 %v345, %v352
    %v358 = vadd.f32 %v346, %v354
    %vm359 = vcmask 7168
    %360 = vst.msk [vmem:[#allocation3] sm:$0xff] %vm359, %v355
    %361 = vst.msk [vmem:[#allocation3 + $0x8] sm:$0xff] %vm359, %v356
    %362 = vst.msk [vmem:[#allocation3 + $0x10] sm:$0xff] %vm359, %v357
    %363 = vst.msk [vmem:[#allocation3 + $0x18] sm:$0xff] %vm359, %v358
    %364 = vst.msk [vmem:[#allocation2] sm:$0xff] %vm359, %v287
    %365 = vst.msk [vmem:[#allocation2 + $0x8] sm:$0xff] %vm359, %v288
    %366 = vst.msk [vmem:[#allocation2 + $0x10] sm:$0xff] %vm359, %v289
    %367 = vst.msk [vmem:[#allocation2 + $0x18] sm:$0xff] %vm359, %v290
    %v368 = vld [vmem:[#allocation4] sm:$0xff]
    %v369 = vld [vmem:[#allocation4 + $0x8] sm:$0xff]
    %v370 = vld [vmem:[#allocation4 + $0x10] sm:$0xff]
    %v371 = vld [vmem:[#allocation4 + $0x18] sm:$0xff]
    %v372 = vmul.f32 %v267, %v205
    %v373 = vmul.f32 %v268, %v206
    %v374 = vmul.f32 %v269, %v207
    %v375 = vmul.f32 %v270, %v208
    %376 = vadd.xlane.f32.xlu0 %v372
    %v377 = vpop.xlane.xlu0 %376
    %378 = vadd.xlane.f32.xlu0 %v373
    %v379 = vpop.xlane.xlu0 %378
    %380 = vadd.xlane.f32.xlu0 %v374
    %v381 = vpop.xlane.xlu0 %380
    %382 = vadd.xlane.f32.xlu0 %v375
    %v383 = vpop.xlane.xlu0 %382
    %v384 = vadd.f32 %v368, %v377
    %v385 = vadd.f32 %v369, %v379
    %v386 = vadd.f32 %v370, %v381
    %v387 = vadd.f32 %v371, %v383
    %388 = vst.msk [vmem:[#allocation4] sm:$0xff] %vm359, %v384
    %389 = vst.msk [vmem:[#allocation4 + $0x8] sm:$0xff] %vm359, %v385
    %390 = vst.msk [vmem:[#allocation4 + $0x10] sm:$0xff] %vm359, %v386
    %391 = vst.msk [vmem:[#allocation4 + $0x18] sm:$0xff] %vm359, %v387
    %v392 = vld [vmem:[#allocation5] sm:$0xff]
    %v393 = vld [vmem:[#allocation5 + $0x8] sm:$0xff]
    %v394 = vld [vmem:[#allocation5 + $0x10] sm:$0xff]
    %v395 = vld [vmem:[#allocation5 + $0x18] sm:$0xff]
    %396 = vadd.xlane.f32.xlu0 %v267
    %v397 = vpop.xlane.xlu0 %396
    %398 = vadd.xlane.f32.xlu0 %v268
    %v399 = vpop.xlane.xlu0 %398
    %400 = vadd.xlane.f32.xlu0 %v269
    %v401 = vpop.xlane.xlu0 %400
    %402 = vadd.xlane.f32.xlu0 %v270
    %v403 = vpop.xlane.xlu0 %402
    %v404 = vadd.f32 %v392, %v397
    %v405 = vadd.f32 %v393, %v399
    %v406 = vadd.f32 %v394, %v401
    %v407 = vadd.f32 %v395, %v403
    %408 = vst.msk [vmem:[#allocation5] sm:$0xff] %vm359, %v404
    %409 = vst.msk [vmem:[#allocation5 + $0x8] sm:$0xff] %vm359, %v405
    %410 = vst.msk [vmem:[#allocation5 + $0x10] sm:$0xff] %vm359, %v406
    %411 = vst.msk [vmem:[#allocation5 + $0x18] sm:$0xff] %vm359, %v407
    // Predicated region
    $region22: #{tpu_custom_call.1} parent=1 // pred_check
      %p412 = pneg %p18
    $region23: #{tpu_custom_call.1} parent=1 // pred_check_branch
      %414 = sbr.rel (%p412) target = $region25
    $region24: #{tpu_custom_call.1} parent=1 // pred_region
      %vm415 = vcmp.lt.s32.totalorder %v216, 32
      %vm416 = vcmp.lt.s32.totalorder %v217, 32
      %vm417 = vcmp.lt.s32.totalorder %v218, 32
      %vm418 = vcmp.lt.s32.totalorder %v219, 32
      %v419 = vld [vmem:[#allocation2] sm:$0xff]
      %v420 = vld [vmem:[#allocation2 + $0x8] sm:$0xff]
      %v421 = vld [vmem:[#allocation2 + $0x10] sm:$0xff]
      %v422 = vld [vmem:[#allocation2 + $0x18] sm:$0xff]
      %v423 = vld [vmem:[#allocation3] sm:$0xff]
      %v424 = vld [vmem:[#allocation3 + $0x8] sm:$0xff]
      %v425 = vld [vmem:[#allocation3 + $0x10] sm:$0xff]
      %v426 = vld [vmem:[#allocation3 + $0x18] sm:$0xff]
      %v427 = vlog2.pop %v423
      %v428 = vmul.f32 %v427, 0.6931472
      %v429 = vlog2.pop %v424
      %v430 = vmul.f32 %v429, 0.6931472
      %v431 = vlog2.pop %v425
      %v432 = vmul.f32 %v431, 0.6931472
      %v433 = vlog2.pop %v426
      %v434 = vmul.f32 %v433, 0.6931472
      %v435 = vadd.f32 %v419, %v428
      %v436 = vadd.f32 %v420, %v430
      %v437 = vadd.f32 %v421, %v432
      %v438 = vadd.f32 %v422, %v434
      %v439 = vld [vmem:[#allocation5] sm:$0xff]
      %v440 = vld [vmem:[#allocation5 + $0x8] sm:$0xff]
      %v441 = vld [vmem:[#allocation5 + $0x10] sm:$0xff]
      %v442 = vld [vmem:[#allocation5 + $0x18] sm:$0xff]
      %v443 = vsel %vm415, %v439, 1.0
      %v444 = vsel %vm416, %v440, 1.0
      %v445 = vsel %vm417, %v441, 1.0
      %v446 = vsel %vm418, %v442, 1.0
      %v447 = vld [vmem:[#allocation4] sm:$0xff]
      %v448 = vld [vmem:[#allocation4 + $0x8] sm:$0xff]
      %v449 = vld [vmem:[#allocation4 + $0x10] sm:$0xff]
      %v450 = vld [vmem:[#allocation4 + $0x18] sm:$0xff]
      %v451 = vmul.f32 %v439, %v435
      %v452 = vmul.f32 %v440, %v436
      %v453 = vmul.f32 %v441, %v437
      %v454 = vmul.f32 %v442, %v438
      %v455 = vsub.f32 %v447, %v451
      %v456 = vsub.f32 %v448, %v452
      %v457 = vsub.f32 %v449, %v453
      %v458 = vsub.f32 %v450, %v454
      %v459 = vrcp.pop %v443
      %v460 = vmul.f32 %v455, %v459
      %v461 = vrcp.pop %v444
      %v462 = vmul.f32 %v456, %v461
      %v463 = vrcp.pop %v445
      %v464 = vmul.f32 %v457, %v463
      %v465 = vrcp.pop %v446
      %v466 = vmul.f32 %v458, %v465
      %v467 = vmul.f32 %v460, -1.0
      %v468 = vmul.f32 %v462, -1.0
      %v469 = vmul.f32 %v464, -1.0
      %v470 = vmul.f32 %v466, -1.0
      %v471 = vsel %vm415, %v467, 0.0
      %v472 = vsel %vm416, %v468, 0.0
      %v473 = vsel %vm417, %v469, 0.0
      %v474 = vsel %vm418, %v470, 0.0
      %v475 = vsel %vm359, %v471, 0.0
      %v476 = vsel %vm359, %v472, 0.0
      %v477 = vadd.f32 %v475, %v476
      %v478 = vsel %vm359, %v473, 0.0
      %v479 = vadd.f32 %v477, %v478
      %v480 = vsel %vm359, %v474, 0.0
      %v481 = vadd.f32 %v479, %v480
      %482 = vadd.xlane.f32.xlu0 %v481
      %v483 = vpop.xlane.xlu0 %482
      %v484 = vrot.slane %v483, 4
      %v485 = vadd.f32 %v483, %v484
      %v486 = vrot.slane %v485, 2
      %v487 = vadd.f32 %v485, %v486
      %v488 = vrot.slane %v487, 1
      %v489 = vadd.f32 %v487, %v488
      %s490 = vtos %v489
      %v491 = vstv %s490
      %vm492 = vcmask 0
      %493 = vst.msk [vmem:[#allocation6] sm:$0x1] %vm492, %v491
    $region25: #{tpu_custom_call.1} parent=1 // pred_fallthru
      _
    // Predicated region
    $region26: #{tpu_custom_call.1} parent=1 // pred_check
      _
    $region27: #{tpu_custom_call.1} parent=1 // pred_check_branch
      %495 = sbr.rel (0) target = $region29
    $region28: #{tpu_custom_call.1} parent=1 // pred_region
      %s497 = ssub.s32 16, 16
      %498 = vsyncadd [#allocation7], %s497
      %s500 = sshll.u32 [#allocation6], 4
      %s501 = int_to_ptr.vmem [resolvable:$true] %s500
      %503 = dma.vmem_to_hbm [thread:$0]  %s501, 16, %s4, [#allocation7]
    $region29: #{tpu_custom_call.1} parent=1 // pred_fallthru
      _
    // Predicated region
    $region30: #{tpu_custom_call.1} parent=1 // pred_check
      _
    $region31: #{tpu_custom_call.1} parent=1 // pred_check_branch
      %505 = sbr.rel (0) target = $region33
    $region32: #{tpu_custom_call.1} parent=1 // pred_region
      %506 = dma.done [#allocation7], 16
    $region33: #{tpu_custom_call.1} parent=1 // pred_fallthru
      _
    %507 = vsyncpa [#allocation7], 1

</llo_original>
